<compile_context>
chip_gen: v7x
topology: tpu7x:2x2x1
jax: 0.10.0
libtpu: 0.0.40
codegen_flags: <defaults>
</compile_context>

<pallas_src>
import functools

import jax
import jax.numpy as jnp
from jax.experimental import pallas as pl
from jax.experimental.pallas import tpu as pltpu


def _largest_divisor_leq(n, cap):
    for d in range(min(n, cap), 0, -1):
        if n % d == 0:
            return d
    return 1


def _dw_pw_kernel(x_ref, wdw_ref, bdw_ref, wpw_ref, bpw_ref, o_ref,
                  *, ksize, stride, tile_h, w_out):
    # x_ref:   (H_pad, W_pad, C)   padded NHWC input, channels pre-expanded to C=dim_out
    # wdw_ref: (K*K, C)            depthwise weights, tap-major, channel on lanes
    # bdw_ref: (1, C)              depthwise bias
    # wpw_ref: (C, C)              pointwise weight, already (in_ch, out_ch)
    # bpw_ref: (1, C)              pointwise bias
    # o_ref:   (tile_h, W_out, C)  output rows for this grid step
    c = o_ref.shape[-1]
    ht = pl.program_id(1)
    h_base = pl.multiple_of(ht * (tile_h * stride), tile_h * stride)

    wdw = wdw_ref[...].astype(jnp.float32)                       # (K*K, C)
    acc = jnp.zeros((tile_h, w_out, c), jnp.float32)

    # Depthwise conv: K*K shifted multiply-adds (VPU), channels on lanes.
    # TODO(synk): stride > 1 uses sublane-strided pl.ds; only the stride == 1
    # path is exercised by the demo below.
    for kh in range(ksize):
        if stride == 1:
            row_sl = pl.ds(h_base + kh, tile_h)
        else:
            row_sl = pl.ds(h_base + kh, tile_h, stride=stride)
        for kw in range(ksize):
            if stride == 1:
                col_sl = pl.ds(kw, w_out)
            else:
                col_sl = pl.ds(kw, w_out, stride=stride)
            xs = x_ref[row_sl, col_sl, :].astype(jnp.float32)    # (tile_h, w_out, C)
            k = kh * ksize + kw
            acc = acc + xs * wdw[k:k + 1, :]                     # broadcast over lanes
    acc = acc + bdw_ref[...].astype(jnp.float32)

    # Pointwise 1x1 conv == channel matmul on the MXU, fused (no HBM round-trip).
    dw2d = acc.reshape(tile_h * w_out, c)
    out = jnp.dot(dw2d, wpw_ref[...].astype(jnp.float32),
                  preferred_element_type=jnp.float32)
    out = out + bpw_ref[...].astype(jnp.float32)
    o_ref[...] = out.reshape(tile_h, w_out, c).astype(o_ref.dtype)


def depthwise_conv2d_forward(x, dw_weight, dw_bias, pw_weight, pw_bias,
                             *, kernel_size, padding, stride, max_tile_h=8):
    """Pallas forward of DepthWiseConv2d (NCHW in, NCHW out, like PyTorch).

    x:         (B, C_in, H, W)
    dw_weight: (C_out, 1, K, K)    Conv2d(dim_in, dim_out, K, groups=dim_in) weight
    dw_bias:   (C_out,)
    pw_weight: (C_out, C_out, 1, 1) 1x1 Conv2d weight
    pw_bias:   (C_out,)
    """
    B, C_in, H, W = x.shape
    C_out = dw_weight.shape[0]
    assert C_out % C_in == 0, "groups=dim_in requires dim_out % dim_in == 0"
    mult = C_out // C_in
    K, P, S = kernel_size, padding, stride
    H_out = (H + 2 * P - K) // S + 1
    W_out = (W + 2 * P - K) // S + 1

    # ---- glue: NCHW -> NHWC, expand grouped channels, zero-pad spatially ----
    x_nhwc = jnp.transpose(x, (0, 2, 3, 1))                      # (B, H, W, C_in)
    if mult > 1:
        # grouped conv: output channel o reads input channel o // mult
        x_nhwc = jnp.repeat(x_nhwc, mult, axis=-1)               # (B, H, W, C_out)
    x_pad = jnp.pad(x_nhwc, ((0, 0), (P, P), (P, P), (0, 0)))
    H_pad, W_pad = H + 2 * P, W + 2 * P

    # depthwise weight (C_out,1,K,K) -> (K*K, C_out): tap-major, channel on lanes
    wdw = jnp.transpose(dw_weight.reshape(C_out, K * K), (1, 0))
    bdw = dw_bias.reshape(1, C_out)
    # pointwise weight (C_out,C_out,1,1) -> (in_ch, out_ch) so kernel does x @ W^T
    wpw = jnp.transpose(pw_weight[:, :, 0, 0], (1, 0))
    bpw = pw_bias.reshape(1, C_out)

    # exact row tiling (no partial blocks -> no OOB reads inside the kernel)
    tile_h = _largest_divisor_leq(H_out, max_tile_h)
    n_ht = H_out // tile_h

    kernel = functools.partial(_dw_pw_kernel, ksize=K, stride=S,
                               tile_h=tile_h, w_out=W_out)

    flops = 2 * B * H_out * W_out * C_out * (K * K + C_out)
    bytes_accessed = 4 * (x_pad.size + wdw.size + wpw.size
                          + B * H_out * W_out * C_out)

    out_nhwc = pl.pallas_call(
        kernel,
        out_shape=jax.ShapeDtypeStruct((B, H_out, W_out, C_out), x.dtype),
        grid=(B, n_ht),
        in_specs=[
            # full padded image per batch element; constant across the row axis
            pl.BlockSpec((None, H_pad, W_pad, C_out), lambda b, h: (b, 0, 0, 0)),
            pl.BlockSpec((K * K, C_out), lambda b, h: (0, 0)),
            pl.BlockSpec((1, C_out), lambda b, h: (0, 0)),
            pl.BlockSpec((C_out, C_out), lambda b, h: (0, 0)),
            pl.BlockSpec((1, C_out), lambda b, h: (0, 0)),
        ],
        out_specs=pl.BlockSpec((None, tile_h, W_out, C_out),
                               lambda b, h: (b, h, 0, 0)),
        compiler_params=pltpu.CompilerParams(
            dimension_semantics=("parallel", "arbitrary"),
            vmem_limit_bytes=64 * 1024 * 1024),
        cost_estimate=pl.CostEstimate(flops=flops, transcendentals=0,
                                      bytes_accessed=bytes_accessed),
    )(x_pad, wdw, bdw, wpw, bpw)

    return jnp.transpose(out_nhwc, (0, 3, 1, 2))                 # back to NCHW


if __name__ == "__main__":
    # Small shapes consistent with the module: dim_in=4, dim_out=8 (mult=2),
    # 16x16 spatial, kernel 3, padding 1, stride 1, batch 2.
    B, C_in, C_out = 2, 4, 8
    H = W = 16
    K, P, S = 3, 1, 1

    key = jax.random.PRNGKey(0)
    kx, k1, k2, k3, k4 = jax.random.split(key, 5)
    x = jax.random.normal(kx, (B, C_in, H, W), dtype=jnp.float32)
    dw_w = jax.random.normal(k1, (C_out, 1, K, K), dtype=jnp.float32) * 0.05
    dw_b = jax.random.normal(k2, (C_out,), dtype=jnp.float32) * 0.05
    pw_w = jax.random.normal(k3, (C_out, C_out, 1, 1), dtype=jnp.float32) * 0.05
    pw_b = jax.random.normal(k4, (C_out,), dtype=jnp.float32) * 0.05

    y = depthwise_conv2d_forward(x, dw_w, dw_b, pw_w, pw_b,
                                 kernel_size=K, padding=P, stride=S)
    jax.block_until_ready(y)

    # ---- pure-JAX reference (exact elementwise f32 math) ----
    mult = C_out // C_in
    H_out = (H + 2 * P - K) // S + 1
    W_out = (W + 2 * P - K) // S + 1
    xp = jnp.pad(x, ((0, 0), (0, 0), (P, P), (P, P)))
    dw = jnp.zeros((B, C_out, H_out, W_out), jnp.float32)
    for kh in range(K):
        for kw in range(K):
            xs = xp[:, :, kh:kh + (H_out - 1) * S + 1:S,
                          kw:kw + (W_out - 1) * S + 1:S]
            xs = jnp.repeat(xs, mult, axis=1)
            dw = dw + xs * dw_w[:, 0, kh, kw].reshape(1, C_out, 1, 1)
    dw = dw + dw_b.reshape(1, C_out, 1, 1)
    y_ref = jnp.zeros((B, C_out, H_out, W_out), jnp.float32)
    for c in range(C_out):
        y_ref = y_ref + dw[:, c:c + 1] * pw_w[:, c, 0, 0].reshape(1, C_out, 1, 1)
    y_ref = y_ref + pw_b.reshape(1, C_out, 1, 1)

    assert y.shape == (B, C_out, H_out, W_out)
    err = float(jnp.max(jnp.abs(y - y_ref)))
    assert jnp.allclose(y, y_ref, atol=2e-3, rtol=2e-3), f"max abs err {err}"

    print("KERNEL_OK")
</pallas_src>

<mosaic_0001>
module attributes {stable_mosaic.version = 11 : i64} {
  func.func @_dw_pw_kernel(%arg0: i32, %arg1: i32, %arg2: memref<1x18x18x8xf32, #tpu.memory_space<vmem>>, %arg3: memref<9x8xf32, #tpu.memory_space<vmem>>, %arg4: memref<1x8xf32, #tpu.memory_space<vmem>>, %arg5: memref<8x8xf32, #tpu.memory_space<vmem>>, %arg6: memref<1x8xf32, #tpu.memory_space<vmem>>, %arg7: memref<1x8x16x8xf32, #tpu.memory_space<vmem>>) attributes {dimension_semantics = [#tpu.dimension_semantics<parallel>, #tpu.dimension_semantics<arbitrary>], iteration_bounds = array<i64: 2, 2>, scalar_prefetch = 0 : i64, scratch_operands = 0 : i64, tpu.core_type = #tpu.core_type<tc>, window_params = [{transform_indices = @transform_0, window_bounds = array<i64: 1, 18, 18, 8>}, {pipeline_mode = #tpu.pipeline_mode<synchronous>, transform_indices = @transform_1, window_bounds = array<i64: 9, 8>}, {pipeline_mode = #tpu.pipeline_mode<synchronous>, transform_indices = @transform_2, window_bounds = array<i64: 1, 8>}, {pipeline_mode = #tpu.pipeline_mode<synchronous>, transform_indices = @transform_3, window_bounds = array<i64: 8, 8>}, {pipeline_mode = #tpu.pipeline_mode<synchronous>, transform_indices = @transform_4, window_bounds = array<i64: 1, 8>}, {transform_indices = @transform_5, window_bounds = array<i64: 1, 8, 16, 8>}]} {
    %c8_i32 = arith.constant 8 : i32
    %0 = arith.muli %arg1, %c8_i32 : i32
    %1 = tpu.assume_multiple %0, 8 : i32
    %c0 = arith.constant 0 : index
    %c0_0 = arith.constant 0 : index
    %2 = vector.load %arg3[%c0, %c0_0] : memref<9x8xf32, #tpu.memory_space<vmem>>, vector<9x8xf32>
    %cst = arith.constant 0.000000e+00 : f32
    %3 = vector.broadcast %cst : f32 to vector<8x16x8xf32>
    %c0_i32 = arith.constant 0 : i32
    %4 = arith.addi %1, %c0_i32 : i32
    %c0_1 = arith.constant 0 : index
    %5 = arith.index_cast %4 : i32 to index
    %c0_2 = arith.constant 0 : index
    %c0_3 = arith.constant 0 : index
    %6 = vector.load %arg2[%c0_1, %5, %c0_2, %c0_3] : memref<1x18x18x8xf32, #tpu.memory_space<vmem>>, vector<1x8x16x8xf32>
    %7 = vector.shape_cast %6 : vector<1x8x16x8xf32> to vector<8x16x8xf32>
    %8 = vector.extract_strided_slice %2 {offsets = [0, 0], sizes = [1, 8], strides = [1, 1]} : vector<9x8xf32> to vector<1x8xf32>
    %9 = vector.shape_cast %8 : vector<1x8xf32> to vector<1x1x8xf32>
    %10 = vector.broadcast %9 : vector<1x1x8xf32> to vector<8x16x8xf32>
    %11 = arith.mulf %7, %10 : vector<8x16x8xf32>
    %12 = arith.addf %3, %11 : vector<8x16x8xf32>
    %c0_4 = arith.constant 0 : index
    %13 = arith.index_cast %4 : i32 to index
    %c1 = arith.constant 1 : index
    %c0_5 = arith.constant 0 : index
    %14 = vector.load %arg2[%c0_4, %13, %c1, %c0_5] : memref<1x18x18x8xf32, #tpu.memory_space<vmem>>, vector<1x8x16x8xf32>
    %15 = vector.shape_cast %14 : vector<1x8x16x8xf32> to vector<8x16x8xf32>
    %16 = vector.extract_strided_slice %2 {offsets = [1, 0], sizes = [1, 8], strides = [1, 1]} : vector<9x8xf32> to vector<1x8xf32>
    %17 = vector.shape_cast %16 : vector<1x8xf32> to vector<1x1x8xf32>
    %18 = vector.broadcast %17 : vector<1x1x8xf32> to vector<8x16x8xf32>
    %19 = arith.mulf %15, %18 : vector<8x16x8xf32>
    %20 = arith.addf %12, %19 : vector<8x16x8xf32>
    %c0_6 = arith.constant 0 : index
    %21 = arith.index_cast %4 : i32 to index
    %c2 = arith.constant 2 : index
    %c0_7 = arith.constant 0 : index
    %22 = vector.load %arg2[%c0_6, %21, %c2, %c0_7] : memref<1x18x18x8xf32, #tpu.memory_space<vmem>>, vector<1x8x16x8xf32>
    %23 = vector.shape_cast %22 : vector<1x8x16x8xf32> to vector<8x16x8xf32>
    %24 = vector.extract_strided_slice %2 {offsets = [2, 0], sizes = [1, 8], strides = [1, 1]} : vector<9x8xf32> to vector<1x8xf32>
    %25 = vector.shape_cast %24 : vector<1x8xf32> to vector<1x1x8xf32>
    %26 = vector.broadcast %25 : vector<1x1x8xf32> to vector<8x16x8xf32>
    %27 = arith.mulf %23, %26 : vector<8x16x8xf32>
    %28 = arith.addf %20, %27 : vector<8x16x8xf32>
    %c1_i32 = arith.constant 1 : i32
    %29 = arith.addi %1, %c1_i32 : i32
    %c0_8 = arith.constant 0 : index
    %30 = arith.index_cast %29 : i32 to index
    %c0_9 = arith.constant 0 : index
    %c0_10 = arith.constant 0 : index
    %31 = vector.load %arg2[%c0_8, %30, %c0_9, %c0_10] : memref<1x18x18x8xf32, #tpu.memory_space<vmem>>, vector<1x8x16x8xf32>
    %32 = vector.shape_cast %31 : vector<1x8x16x8xf32> to vector<8x16x8xf32>
    %33 = vector.extract_strided_slice %2 {offsets = [3, 0], sizes = [1, 8], strides = [1, 1]} : vector<9x8xf32> to vector<1x8xf32>
    %34 = vector.shape_cast %33 : vector<1x8xf32> to vector<1x1x8xf32>
    %35 = vector.broadcast %34 : vector<1x1x8xf32> to vector<8x16x8xf32>
    %36 = arith.mulf %32, %35 : vector<8x16x8xf32>
    %37 = arith.addf %28, %36 : vector<8x16x8xf32>
    %c0_11 = arith.constant 0 : index
    %38 = arith.index_cast %29 : i32 to index
    %c1_12 = arith.constant 1 : index
    %c0_13 = arith.constant 0 : index
    %39 = vector.load %arg2[%c0_11, %38, %c1_12, %c0_13] : memref<1x18x18x8xf32, #tpu.memory_space<vmem>>, vector<1x8x16x8xf32>
    %40 = vector.shape_cast %39 : vector<1x8x16x8xf32> to vector<8x16x8xf32>
    %41 = vector.extract_strided_slice %2 {offsets = [4, 0], sizes = [1, 8], strides = [1, 1]} : vector<9x8xf32> to vector<1x8xf32>
    %42 = vector.shape_cast %41 : vector<1x8xf32> to vector<1x1x8xf32>
    %43 = vector.broadcast %42 : vector<1x1x8xf32> to vector<8x16x8xf32>
    %44 = arith.mulf %40, %43 : vector<8x16x8xf32>
    %45 = arith.addf %37, %44 : vector<8x16x8xf32>
    %c0_14 = arith.constant 0 : index
    %46 = arith.index_cast %29 : i32 to index
    %c2_15 = arith.constant 2 : index
    %c0_16 = arith.constant 0 : index
    %47 = vector.load %arg2[%c0_14, %46, %c2_15, %c0_16] : memref<1x18x18x8xf32, #tpu.memory_space<vmem>>, vector<1x8x16x8xf32>
    %48 = vector.shape_cast %47 : vector<1x8x16x8xf32> to vector<8x16x8xf32>
    %49 = vector.extract_strided_slice %2 {offsets = [5, 0], sizes = [1, 8], strides = [1, 1]} : vector<9x8xf32> to vector<1x8xf32>
    %50 = vector.shape_cast %49 : vector<1x8xf32> to vector<1x1x8xf32>
    %51 = vector.broadcast %50 : vector<1x1x8xf32> to vector<8x16x8xf32>
    %52 = arith.mulf %48, %51 : vector<8x16x8xf32>
    %53 = arith.addf %45, %52 : vector<8x16x8xf32>
    %c2_i32 = arith.constant 2 : i32
    %54 = arith.addi %1, %c2_i32 : i32
    %c0_17 = arith.constant 0 : index
    %55 = arith.index_cast %54 : i32 to index
    %c0_18 = arith.constant 0 : index
    %c0_19 = arith.constant 0 : index
    %56 = vector.load %arg2[%c0_17, %55, %c0_18, %c0_19] : memref<1x18x18x8xf32, #tpu.memory_space<vmem>>, vector<1x8x16x8xf32>
    %57 = vector.shape_cast %56 : vector<1x8x16x8xf32> to vector<8x16x8xf32>
    %58 = vector.extract_strided_slice %2 {offsets = [6, 0], sizes = [1, 8], strides = [1, 1]} : vector<9x8xf32> to vector<1x8xf32>
    %59 = vector.shape_cast %58 : vector<1x8xf32> to vector<1x1x8xf32>
    %60 = vector.broadcast %59 : vector<1x1x8xf32> to vector<8x16x8xf32>
    %61 = arith.mulf %57, %60 : vector<8x16x8xf32>
    %62 = arith.addf %53, %61 : vector<8x16x8xf32>
    %c0_20 = arith.constant 0 : index
    %63 = arith.index_cast %54 : i32 to index
    %c1_21 = arith.constant 1 : index
    %c0_22 = arith.constant 0 : index
    %64 = vector.load %arg2[%c0_20, %63, %c1_21, %c0_22] : memref<1x18x18x8xf32, #tpu.memory_space<vmem>>, vector<1x8x16x8xf32>
    %65 = vector.shape_cast %64 : vector<1x8x16x8xf32> to vector<8x16x8xf32>
    %66 = vector.extract_strided_slice %2 {offsets = [7, 0], sizes = [1, 8], strides = [1, 1]} : vector<9x8xf32> to vector<1x8xf32>
    %67 = vector.shape_cast %66 : vector<1x8xf32> to vector<1x1x8xf32>
    %68 = vector.broadcast %67 : vector<1x1x8xf32> to vector<8x16x8xf32>
    %69 = arith.mulf %65, %68 : vector<8x16x8xf32>
    %70 = arith.addf %62, %69 : vector<8x16x8xf32>
    %c0_23 = arith.constant 0 : index
    %71 = arith.index_cast %54 : i32 to index
    %c2_24 = arith.constant 2 : index
    %c0_25 = arith.constant 0 : index
    %72 = vector.load %arg2[%c0_23, %71, %c2_24, %c0_25] : memref<1x18x18x8xf32, #tpu.memory_space<vmem>>, vector<1x8x16x8xf32>
    %73 = vector.shape_cast %72 : vector<1x8x16x8xf32> to vector<8x16x8xf32>
    %74 = vector.extract_strided_slice %2 {offsets = [8, 0], sizes = [1, 8], strides = [1, 1]} : vector<9x8xf32> to vector<1x8xf32>
    %75 = vector.shape_cast %74 : vector<1x8xf32> to vector<1x1x8xf32>
    %76 = vector.broadcast %75 : vector<1x1x8xf32> to vector<8x16x8xf32>
    %77 = arith.mulf %73, %76 : vector<8x16x8xf32>
    %78 = arith.addf %70, %77 : vector<8x16x8xf32>
    %c0_26 = arith.constant 0 : index
    %c0_27 = arith.constant 0 : index
    %79 = vector.load %arg4[%c0_26, %c0_27] : memref<1x8xf32, #tpu.memory_space<vmem>>, vector<1x8xf32>
    %80 = vector.shape_cast %79 : vector<1x8xf32> to vector<1x1x8xf32>
    %81 = vector.broadcast %80 : vector<1x1x8xf32> to vector<8x16x8xf32>
    %82 = arith.addf %78, %81 : vector<8x16x8xf32>
    %83 = vector.shape_cast %82 : vector<8x16x8xf32> to vector<128x8xf32>
    %c0_28 = arith.constant 0 : index
    %c0_29 = arith.constant 0 : index
    %84 = vector.load %arg5[%c0_28, %c0_29] : memref<8x8xf32, #tpu.memory_space<vmem>>, vector<8x8xf32>
    %cst_30 = arith.constant dense<0.000000e+00> : vector<128x8xf32>
    %85 = tpu.matmul %83, %84, %cst_30 {dimension_numbers = #tpu.dot_dimension_numbers<[1], [0], [0], [1], [0, 0, 1, 1], [], []>} : vector<128x8xf32>, vector<8x8xf32>, vector<128x8xf32> -> vector<128x8xf32>
    %c0_31 = arith.constant 0 : index
    %c0_32 = arith.constant 0 : index
    %86 = vector.load %arg6[%c0_31, %c0_32] : memref<1x8xf32, #tpu.memory_space<vmem>>, vector<1x8xf32>
    %87 = vector.broadcast %86 : vector<1x8xf32> to vector<128x8xf32>
    %88 = arith.addf %85, %87 : vector<128x8xf32>
    %89 = vector.shape_cast %88 : vector<128x8xf32> to vector<8x16x8xf32>
    %c0_33 = arith.constant 0 : index
    %c0_34 = arith.constant 0 : index
    %c0_35 = arith.constant 0 : index
    %c0_36 = arith.constant 0 : index
    %90 = vector.load %arg7[%c0_33, %c0_34, %c0_35, %c0_36] : memref<1x8x16x8xf32, #tpu.memory_space<vmem>>, vector<1x8x16x8xf32>
    %91 = vector.shape_cast %90 : vector<1x8x16x8xf32> to vector<8x16x8xf32>
    %92 = vector.shape_cast %89 : vector<8x16x8xf32> to vector<1x8x16x8xf32>
    tpu.vector_store %arg7[%c0_33, %c0_34, %c0_35, %c0_36], %92 {strides = array<i32>} : memref<1x8x16x8xf32, #tpu.memory_space<vmem>>, vector<1x8x16x8xf32>,
    return
  }
  func.func @transform_0(%arg0: i32, %arg1: i32) -> (i32, i32, i32, i32) {
    %c0_i32 = arith.constant 0 : i32
    %c0_i32_0 = arith.constant 0 : i32
    %c0_i32_1 = arith.constant 0 : i32
    %c0_i32_2 = arith.constant 0 : i32
    return %arg0, %c0_i32, %c0_i32_0, %c0_i32_1 : i32, i32, i32, i32
  }
  func.func @transform_1(%arg0: i32, %arg1: i32) -> (i32, i32) {
    %c0_i32 = arith.constant 0 : i32
    %c0_i32_0 = arith.constant 0 : i32
    %c0_i32_1 = arith.constant 0 : i32
    return %c0_i32, %c0_i32_0 : i32, i32
  }
  func.func @transform_2(%arg0: i32, %arg1: i32) -> (i32, i32) {
    %c0_i32 = arith.constant 0 : i32
    %c0_i32_0 = arith.constant 0 : i32
    %c0_i32_1 = arith.constant 0 : i32
    return %c0_i32, %c0_i32_0 : i32, i32
  }
  func.func @transform_3(%arg0: i32, %arg1: i32) -> (i32, i32) {
    %c0_i32 = arith.constant 0 : i32
    %c0_i32_0 = arith.constant 0 : i32
    %c0_i32_1 = arith.constant 0 : i32
    return %c0_i32, %c0_i32_0 : i32, i32
  }
  func.func @transform_4(%arg0: i32, %arg1: i32) -> (i32, i32) {
    %c0_i32 = arith.constant 0 : i32
    %c0_i32_0 = arith.constant 0 : i32
    %c0_i32_1 = arith.constant 0 : i32
    return %c0_i32, %c0_i32_0 : i32, i32
  }
  func.func @transform_5(%arg0: i32, %arg1: i32) -> (i32, i32, i32, i32) {
    %c0_i32 = arith.constant 0 : i32
    %c0_i32_0 = arith.constant 0 : i32
    %c0_i32_1 = arith.constant 0 : i32
    return %arg0, %arg1, %c0_i32, %c0_i32_0 : i32, i32, i32, i32
  }
}

</mosaic_0001>

<llo_original>
// kernel: tpu_custom_call.1
$region0: #{tpu_custom_call.1}
  #allocation0 [shape = 'u32[]', space=smem, size = 0x4, offset = 0x4, fixed_abs, tag = 'smem constant byte address 0x4 - core index']
  #allocation1 [shape = 'u32[144,128]{1,0:T(1,128)}', space=vmem, size = 0x12000, scoped, tag = 'internal scratch']
  %s0 = inlined_call_operand.hbm [shape: f32[2,18,18,8], index: 0, kind: input, shape index: {}]
  %s1 = inlined_call_operand.hbm [shape: f32[9,8], index: 1, kind: input, shape index: {}]
  %s2 = inlined_call_operand.hbm [shape: f32[1,8], index: 2, kind: input, shape index: {}]
  %s3 = inlined_call_operand.hbm [shape: f32[8,8], index: 3, kind: input, shape index: {}]
  %s4 = inlined_call_operand.hbm [shape: f32[1,8], index: 4, kind: input, shape index: {}]
  %s5 = inlined_call_operand.hbm [shape: f32[2,16,16,8], index: 5, kind: output, shape index: {}]
  %s6 = sld [smem:[#allocation0]]
  $region73: #{tpu_custom_call.1} parent=0
    _
  %s8 = ssub.s32 1, %s6
  %s9 = scalar_select 0, %s8, %s6
  $region1: #{tpu_custom_call.1} parent=0
    #allocation2 [shape = 'u8[442368]{0}', space=vmem, size = 0x6c000, scoped, tag = 'input window, operand 0']
    #allocation3 [shape = 's32[2]{0}', space=sflag, size = 0x8, scoped, tag = 'scoped memory for tpu_custom_call.1']
    #allocation4 [shape = 's32[2]{0}', space=sflag, size = 0x8, scoped, tag = 'scoped memory for tpu_custom_call.1']
    #allocation5 [shape = 'u8[8192]{0}', space=vmem, size = 0x2000, scoped, tag = 'input window, operand 1, single buffered']
    #allocation6 [shape = 's32[1]{0}', space=sflag, size = 0x4, scoped, tag = 'scoped memory for tpu_custom_call.1']
    #allocation7 [shape = 'u8[512]{0}', space=vmem, size = 0x400, scoped, tag = 'input window, operand 2, single buffered']
    #allocation8 [shape = 'u8[4096]{0}', space=vmem, size = 0x1000, scoped, tag = 'input window, operand 3, single buffered']
    #allocation9 [shape = 's32[1]{0}', space=sflag, size = 0x4, scoped, tag = 'scoped memory for tpu_custom_call.1']
    #allocation10 [shape = 'u8[512]{0}', space=vmem, size = 0x400, scoped, tag = 'input window, operand 4, single buffered']
    #allocation11 [shape = 'u8[131072]{0}', space=vmem, size = 0x20000, scoped, tag = 'output window, operand 0']
    %10 = vsyncpa [#allocation3], 0
    %s11 = scalar_lea.sflag [#allocation3], 1
    %12 = vsyncpa %s11, 0
    %13 = vsyncpa [#allocation6], 0
    %14 = vsyncpa [#allocation9], 0
    %15 = vsyncpa [#allocation4], 0
    %s16 = scalar_lea.sflag [#allocation4], 1
    %17 = vsyncpa %s16, 0
    loop: start=0, step=1, limit=6
    $region2: #{tpu_custom_call.1} parent=1 // loop_pre_header
      _
    $region3: #{tpu_custom_call.1} parent=1 // loop_header
      %s19 = sphi 0, %s23
      %p20 = scmp.ge.s32.totalorder %s19, 6
      %s26 = sphi 0, %s38
      %s27 = sphi 0, %s34
      %s28 = sphi 0, %s26
      %s29 = sphi 0, %s27
      %s30 = sphi 0, %s28
      %s31 = sphi 0, %s29
      %s41 = sphi 0, %s43
      %s44 = sphi 0, %s41
      %s45 = sphi 0, %s44
      %s61 = sphi 0, %s45
      %s65 = sphi 0, %s65
      %s67 = sphi 0, %s65
      %s68 = sphi 0, %s67
      %s82 = sphi 0, %s68
      %s86 = sphi 0, %s86
      %s88 = sphi 0, %s86
      %s89 = sphi 0, %s88
      %s103 = sphi 0, %s89
      %s107 = sphi 0, %s107
      %s109 = sphi 0, %s107
      %s110 = sphi 0, %s109
      %s124 = sphi 0, %s110
      %s128 = sphi 0, %s128
      %s130 = sphi 0, %s128
      %s131 = sphi 0, %s130
      %s145 = sphi 0, %s131
      %s153 = sphi 0, %s155
      %s156 = sphi 0, %s153
      %s157 = sphi 0, %s156
      %s173 = sphi 0, %s157
    $region4: #{tpu_custom_call.1} parent=1 // loop_header_branch
      %22 = sbr.rel (%p20) target = $region8
    $region5: #{tpu_custom_call.1} parent=1 // loop_body
      %s24 = ssub.s32 %s19, 1
      %s25 = ssub.s32 %s19, 2
      %s32 = sadd.s32 1, %s27
      %p33 = scmp.ge.s32.totalorder %s32, 2
      %s34 = scalar_select %p33, 0, %s32
      %s35 = sadd.s32 1, %s26
      %s36 = scalar_select %p33, %s35, %s26
      %p37 = scmp.ge.s32.totalorder %s36, 2
      %s38 = scalar_select %p37, 0, %s36
      %s39 = ssub.s32 %s26, %s38
      %p40 = scmp.eq.s32.totalorder %s39, 0
      %s42 = sadd.s32 %s41, 1
      %s43 = scalar_select %p40, %s41, %s42
      %p46 = pneg %p40
      %p47 = scmp.eq.s32.totalorder %s19, 3
      %p48 = por %p46, %p47
      %p49 = scmp.ne.s32.totalorder %s41, %s44
      %p50 = scmp.eq.s32.totalorder %s19, 0
      %p51 = por %p49, %p50
      %p52 = scmp.ne.s32.totalorder %s41, %s44
      %p53 = scmp.eq.s32.totalorder %s24, 3
      %p54 = por %p52, %p53
      %p55 = scmp.ne.s32.totalorder %s44, %s45
      %p56 = scmp.eq.s32.totalorder %s24, 0
      %p57 = por %p55, %p56
      %p58 = scmp.ne.s32.totalorder %s44, %s45
      %p59 = scmp.eq.s32.totalorder %s25, 3
      %p60 = por %p58, %p59
      %p62 = scmp.ne.s32.totalorder %s45, %s61
      %p63 = scmp.eq.s32.totalorder %s25, 0
      %p64 = por %p62, %p63
      %s66 = sadd.s32 %s65, 1
      %p69 = scmp.eq.s32.totalorder %s19, 3
      %p70 = scmp.ne.s32.totalorder %s65, %s67
      %p71 = scmp.eq.s32.totalorder %s19, 0
      %p72 = por %p70, %p71
      %p73 = scmp.ne.s32.totalorder %s65, %s67
      %p74 = scmp.eq.s32.totalorder %s24, 3
      %p75 = por %p73, %p74
      %p76 = scmp.ne.s32.totalorder %s67, %s68
      %p77 = scmp.eq.s32.totalorder %s24, 0
      %p78 = por %p76, %p77
      %p79 = scmp.ne.s32.totalorder %s67, %s68
      %p80 = scmp.eq.s32.totalorder %s25, 3
      %p81 = por %p79, %p80
      %p83 = scmp.ne.s32.totalorder %s68, %s82
      %p84 = scmp.eq.s32.totalorder %s25, 0
      %p85 = por %p83, %p84
      %s87 = sadd.s32 %s86, 1
      %p90 = scmp.eq.s32.totalorder %s19, 3
      %p91 = scmp.ne.s32.totalorder %s86, %s88
      %p92 = scmp.eq.s32.totalorder %s19, 0
      %p93 = por %p91, %p92
      %p94 = scmp.ne.s32.totalorder %s86, %s88
      %p95 = scmp.eq.s32.totalorder %s24, 3
      %p96 = por %p94, %p95
      %p97 = scmp.ne.s32.totalorder %s88, %s89
      %p98 = scmp.eq.s32.totalorder %s24, 0
      %p99 = por %p97, %p98
      %p100 = scmp.ne.s32.totalorder %s88, %s89
      %p101 = scmp.eq.s32.totalorder %s25, 3
      %p102 = por %p100, %p101
      %p104 = scmp.ne.s32.totalorder %s89, %s103
      %p105 = scmp.eq.s32.totalorder %s25, 0
      %p106 = por %p104, %p105
      %s108 = sadd.s32 %s107, 1
      %p111 = scmp.eq.s32.totalorder %s19, 3
      %p112 = scmp.ne.s32.totalorder %s107, %s109
      %p113 = scmp.eq.s32.totalorder %s19, 0
      %p114 = por %p112, %p113
      %p115 = scmp.ne.s32.totalorder %s107, %s109
      %p116 = scmp.eq.s32.totalorder %s24, 3
      %p117 = por %p115, %p116
      %p118 = scmp.ne.s32.totalorder %s109, %s110
      %p119 = scmp.eq.s32.totalorder %s24, 0
      %p120 = por %p118, %p119
      %p121 = scmp.ne.s32.totalorder %s109, %s110
      %p122 = scmp.eq.s32.totalorder %s25, 3
      %p123 = por %p121, %p122
      %p125 = scmp.ne.s32.totalorder %s110, %s124
      %p126 = scmp.eq.s32.totalorder %s25, 0
      %p127 = por %p125, %p126
      %s129 = sadd.s32 %s128, 1
      %p132 = scmp.eq.s32.totalorder %s19, 3
      %p133 = scmp.ne.s32.totalorder %s128, %s130
      %p134 = scmp.eq.s32.totalorder %s19, 0
      %p135 = por %p133, %p134
      %p136 = scmp.ne.s32.totalorder %s128, %s130
      %p137 = scmp.eq.s32.totalorder %s24, 3
      %p138 = por %p136, %p137
      %p139 = scmp.ne.s32.totalorder %s130, %s131
      %p140 = scmp.eq.s32.totalorder %s24, 0
      %p141 = por %p139, %p140
      %p142 = scmp.ne.s32.totalorder %s130, %s131
      %p143 = scmp.eq.s32.totalorder %s25, 3
      %p144 = por %p142, %p143
      %p146 = scmp.ne.s32.totalorder %s131, %s145
      %p147 = scmp.eq.s32.totalorder %s25, 0
      %p148 = por %p146, %p147
      %s149 = ssub.s32 %s26, %s38
      %s150 = ssub.s32 %s27, %s34
      %s151 = sor.u32 %s149, %s150
      %p152 = scmp.eq.s32.totalorder %s151, 0
      %s154 = sadd.s32 %s153, 1
      %s155 = scalar_select %p152, %s153, %s154
      %p158 = pneg %p152
      %p159 = scmp.eq.s32.totalorder %s19, 3
      %p160 = por %p158, %p159
      %p161 = scmp.ne.s32.totalorder %s153, %s156
      %p162 = scmp.eq.s32.totalorder %s19, 0
      %p163 = por %p161, %p162
      %p164 = scmp.ne.s32.totalorder %s153, %s156
      %p165 = scmp.eq.s32.totalorder %s24, 3
      %p166 = por %p164, %p165
      %p167 = scmp.ne.s32.totalorder %s156, %s157
      %p168 = scmp.eq.s32.totalorder %s24, 0
      %p169 = por %p167, %p168
      %p170 = scmp.ne.s32.totalorder %s156, %s157
      %p171 = scmp.eq.s32.totalorder %s25, 3
      %p172 = por %p170, %p171
      %p174 = scmp.ne.s32.totalorder %s157, %s173
      %p175 = scmp.eq.s32.totalorder %s25, 0
      %p176 = por %p174, %p175
      %p177 = scmp.le.s32.totalorder 1, %s19
      %p178 = scmp.lt.s32.totalorder %s19, 5
      %p179 = pnand %p177, %p178
      %p180 = pneg %p179
      // Predicated region
      $region9: #{tpu_custom_call.1} parent=5 // pred_check
        _
      $region10: #{tpu_custom_call.1} parent=5 // pred_check_branch
        %182 = sbr.rel (%p179) target = $region12
      $region11: #{tpu_custom_call.1} parent=5 // pred_region
        %s183 = ssub.s32 %s19, 1
        // Predicated region
        $region13: #{tpu_custom_call.1} parent=11 // pred_check
          %p184 = pneg %p78
        $region14: #{tpu_custom_call.1} parent=11 // pred_check_branch
          %186 = sbr.rel (%p184) target = $region16
        $region15: #{tpu_custom_call.1} parent=11 // pred_region
          %s188 = ssub.s32 256, 256
          %189 = vsyncadd [#allocation6], %s188
          %s190 = sshll.u32 [#allocation5], 4
          %s191 = int_to_ptr.vmem [resolvable:$true] %s190
          %196 = dma.hbm_to_vmem [thread:$0]  %s1, 256, %s191, [#allocation6], 128, 128, 8
        $region16: #{tpu_custom_call.1} parent=11 // pred_fallthru
          _
        // Predicated region
        $region17: #{tpu_custom_call.1} parent=11 // pred_check
          %p197 = pneg %p99
        $region18: #{tpu_custom_call.1} parent=11 // pred_check_branch
          %199 = sbr.rel (%p197) target = $region20
        $region19: #{tpu_custom_call.1} parent=11 // pred_region
          %s201 = ssub.s32 16, 16
          %202 = vsyncadd [#allocation6], %s201
          %s204 = sshll.u32 [#allocation7], 4
          %s205 = int_to_ptr.vmem [resolvable:$true] %s204
          %207 = dma.hbm_to_vmem [thread:$0]  %s2, 16, %s205, [#allocation6]
        $region20: #{tpu_custom_call.1} parent=11 // pred_fallthru
          _
        // Predicated region
        $region21: #{tpu_custom_call.1} parent=11 // pred_check
          %p208 = pneg %p120
        $region22: #{tpu_custom_call.1} parent=11 // pred_check_branch
          %210 = sbr.rel (%p208) target = $region24
        $region23: #{tpu_custom_call.1} parent=11 // pred_region
          %s212 = ssub.s32 128, 128
          %213 = vsyncadd [#allocation9], %s212
          %s215 = sshll.u32 [#allocation8], 4
          %s216 = int_to_ptr.vmem [resolvable:$true] %s215
          %218 = dma.hbm_to_vmem [thread:$0]  %s3, 128, %s216, [#allocation9]
        $region24: #{tpu_custom_call.1} parent=11 // pred_fallthru
          _
        // Predicated region
        $region25: #{tpu_custom_call.1} parent=11 // pred_check
          %p219 = pneg %p141
        $region26: #{tpu_custom_call.1} parent=11 // pred_check_branch
          %221 = sbr.rel (%p219) target = $region28
        $region27: #{tpu_custom_call.1} parent=11 // pred_region
          %s223 = ssub.s32 16, 16
          %224 = vsyncadd [#allocation9], %s223
          %s226 = sshll.u32 [#allocation10], 4
          %s227 = int_to_ptr.vmem [resolvable:$true] %s226
          %229 = dma.hbm_to_vmem [thread:$0]  %s4, 16, %s227, [#allocation9]
        $region28: #{tpu_custom_call.1} parent=11 // pred_fallthru
          _
      $region12: #{tpu_custom_call.1} parent=5 // pred_fallthru
        _
      %p230 = scmp.lt.s32.totalorder %s19, 4
      // Predicated region
      $region29: #{tpu_custom_call.1} parent=5 // pred_check
        %p231 = pneg %p230
      $region30: #{tpu_custom_call.1} parent=5 // pred_check_branch
        %233 = sbr.rel (%p231) target = $region32
      $region31: #{tpu_custom_call.1} parent=5 // pred_region
        // Predicated region
        $region33: #{tpu_custom_call.1} parent=31 // pred_check
          %p234 = pneg %p51
        $region34: #{tpu_custom_call.1} parent=31 // pred_check_branch
          %236 = sbr.rel (%p234) target = $region36
        $region35: #{tpu_custom_call.1} parent=31 // pred_region
          %s237 = sand.u32 %s41, 1
          %s238 = scalar_lea.sflag [#allocation3], %s237
          %s239 = sand.u32 %s41, 1
          %s240 = smul.addr %s239, 432
          %s241 = scalar_lea.vmem [#allocation2], %s240
          %s243 = ssub.s32 6912, 6912
          %244 = vsyncadd %s238, %s243
          %s245 = smul.addr %s26, 54
          %s246 = smul.addr %s245, 128
          %s247 = scalar_lea.hbm %s0, %s246
          %s248 = sshll.u32 %s241, 4
          %s249 = int_to_ptr.vmem [resolvable:$true] %s248
          %254 = dma.hbm_to_vmem [thread:$0]  %s247, 6912, %s249, %s238, 128, 128, 8
        $region36: #{tpu_custom_call.1} parent=31 // pred_fallthru
          _
      $region32: #{tpu_custom_call.1} parent=5 // pred_fallthru
        _
      %p255 = scmp.le.s32.totalorder 1, %s19
      %p256 = scmp.lt.s32.totalorder %s19, 5
      %p257 = pnand %p255, %p256
      %p258 = pneg %p257
      // Predicated region
      $region37: #{tpu_custom_call.1} parent=5 // pred_check
        _
      $region38: #{tpu_custom_call.1} parent=5 // pred_check_branch
        %260 = sbr.rel (%p257) target = $region40
      $region39: #{tpu_custom_call.1} parent=5 // pred_region
        %s261 = ssub.s32 %s19, 1
        %s262 = sand.u32 %s44, 1
        %s263 = scalar_lea.sflag [#allocation3], %s262
        %s264 = sand.u32 %s44, 1
        %s265 = smul.addr %s264, 432
        %s266 = scalar_lea.vmem [#allocation2], %s265
        // Predicated region
        $region41: #{tpu_custom_call.1} parent=39 // pred_check
          %p267 = pneg %p57
        $region42: #{tpu_custom_call.1} parent=39 // pred_check_branch
          %269 = sbr.rel (%p267) target = $region44
        $region43: #{tpu_custom_call.1} parent=39 // pred_region
          %270 = dma.done %s263, 6912
        $region44: #{tpu_custom_call.1} parent=39 // pred_fallthru
          _
        // Predicated region
        $region45: #{tpu_custom_call.1} parent=39 // pred_check
          %p271 = pneg %p78
        $region46: #{tpu_custom_call.1} parent=39 // pred_check_branch
          %273 = sbr.rel (%p271) target = $region48
        $region47: #{tpu_custom_call.1} parent=39 // pred_region
          %274 = dma.done [#allocation6], 256
        $region48: #{tpu_custom_call.1} parent=39 // pred_fallthru
          _
        // Predicated region
        $region49: #{tpu_custom_call.1} parent=39 // pred_check
          %p275 = pneg %p99
        $region50: #{tpu_custom_call.1} parent=39 // pred_check_branch
          %277 = sbr.rel (%p275) target = $region52
        $region51: #{tpu_custom_call.1} parent=39 // pred_region
          %278 = dma.done [#allocation6], 16
        $region52: #{tpu_custom_call.1} parent=39 // pred_fallthru
          _
        // Predicated region
        $region53: #{tpu_custom_call.1} parent=39 // pred_check
          %p279 = pneg %p120
        $region54: #{tpu_custom_call.1} parent=39 // pred_check_branch
          %281 = sbr.rel (%p279) target = $region56
        $region55: #{tpu_custom_call.1} parent=39 // pred_region
          %282 = dma.done [#allocation9], 128
        $region56: #{tpu_custom_call.1} parent=39 // pred_fallthru
          _
        // Predicated region
        $region57: #{tpu_custom_call.1} parent=39 // pred_check
          %p283 = pneg %p141
        $region58: #{tpu_custom_call.1} parent=39 // pred_check_branch
          %285 = sbr.rel (%p283) target = $region60
        $region59: #{tpu_custom_call.1} parent=39 // pred_region
          %286 = dma.done [#allocation9], 16
        $region60: #{tpu_custom_call.1} parent=39 // pred_fallthru
          _
        %s287 = sand.u32 %s44, 1
        %s288 = scalar_lea.sflag [#allocation3], %s287
        %s289 = sand.u32 %s44, 1
        %s290 = smul.addr %s289, 432
        %s291 = scalar_lea.vmem [#allocation2], %s290
        %p292 = pneg %p57
        %p293 = pneg %p54
        %p294 = pneg %p78
        %p295 = pneg %p75
        %p296 = pneg %p99
        %p297 = pneg %p96
        %p298 = pneg %p120
        %p299 = pneg %p117
        %p300 = pneg %p141
        %p301 = pneg %p138
        %p302 = pneg %p169
        %p303 = pneg %p166
        %s304 = sand.u32 %s156, 1
        %s305 = scalar_lea.sflag [#allocation4], %s304
        %s306 = sand.u32 %s156, 1
        %s307 = smul.addr %s306, 128
        %s308 = scalar_lea.vmem [#allocation11], %s307
        %s309 = smul.u32 8, %s29
        %s310 = smul.u32 %s29, 8
        %v311 = vld [vmem:[#allocation5] sm:$0xff]
        %v312 = vld [vmem:[#allocation5 + $0x8] sm:$0x1]
        %s313 = smul.u32 %s310, 24
        %s314 = scalar_lea.vmem %s266, %s313 [#allocation2]
        %v315 = vld [vmem:[%s314] sm:$0xff]
        %v316 = vld [vmem:[%s314 + $0x8] sm:$0xff]
        %v317 = vld [vmem:[%s314 + $0x18] sm:$0xff]
        %v318 = vld [vmem:[%s314 + $0x20] sm:$0xff]
        %v319 = vld [vmem:[%s314 + $0x30] sm:$0xff]
        %v320 = vld [vmem:[%s314 + $0x38] sm:$0xff]
        %v321 = vld [vmem:[%s314 + $0x48] sm:$0xff]
        %v322 = vld [vmem:[%s314 + $0x50] sm:$0xff]
        %v323 = vld [vmem:[%s314 + $0x60] sm:$0xff]
        %v324 = vld [vmem:[%s314 + $0x68] sm:$0xff]
        %v325 = vld [vmem:[%s314 + $0x78] sm:$0xff]
        %v326 = vld [vmem:[%s314 + $0x80] sm:$0xff]
        %v327 = vld [vmem:[%s314 + $0x90] sm:$0xff]
        %v328 = vld [vmem:[%s314 + $0x98] sm:$0xff]
        %v329 = vld [vmem:[%s314 + $0xa8] sm:$0xff]
        %v330 = vld [vmem:[%s314 + $0xb0] sm:$0xff]
        %v331 = vlaneseq
        %v332 = vshrl.u32 %v331, 7
        %v333 = vsub.s32 0, %v332
        %v334 = vrot.slane %v311, %v333
        %v335 = vmul.f32 %v315, %v334
        %v336 = vmul.f32 %v316, %v334
        %v337 = vmul.f32 %v317, %v334
        %v338 = vmul.f32 %v318, %v334
        %v339 = vmul.f32 %v319, %v334
        %v340 = vmul.f32 %v320, %v334
        %v341 = vmul.f32 %v321, %v334
        %v342 = vmul.f32 %v322, %v334
        %v343 = vmul.f32 %v323, %v334
        %v344 = vmul.f32 %v324, %v334
        %v345 = vmul.f32 %v325, %v334
        %v346 = vmul.f32 %v326, %v334
        %v347 = vmul.f32 %v327, %v334
        %v348 = vmul.f32 %v328, %v334
        %v349 = vmul.f32 %v329, %v334
        %v350 = vmul.f32 %v330, %v334
        %v351 = vadd.f32 %v335, 0.0
        %v352 = vadd.f32 %v336, 0.0
        %v353 = vadd.f32 %v337, 0.0
        %v354 = vadd.f32 %v338, 0.0
        %v355 = vadd.f32 %v339, 0.0
        %v356 = vadd.f32 %v340, 0.0
        %v357 = vadd.f32 %v341, 0.0
        %v358 = vadd.f32 %v342, 0.0
        %v359 = vadd.f32 %v343, 0.0
        %v360 = vadd.f32 %v344, 0.0
        %v361 = vadd.f32 %v345, 0.0
        %v362 = vadd.f32 %v346, 0.0
        %v363 = vadd.f32 %v347, 0.0
        %v364 = vadd.f32 %v348, 0.0
        %v365 = vadd.f32 %v349, 0.0
        %v366 = vadd.f32 %v350, 0.0
        %v367 = vld [vmem:[%s314 + $0x1] sm:$0xff]
        %v368 = vld [vmem:[%s314 + $0x9] sm:$0xff]
        %v369 = vld [vmem:[%s314 + $0x19] sm:$0xff]
        %v370 = vld [vmem:[%s314 + $0x21] sm:$0xff]
        %v371 = vld [vmem:[%s314 + $0x31] sm:$0xff]
        %v372 = vld [vmem:[%s314 + $0x39] sm:$0xff]
        %v373 = vld [vmem:[%s314 + $0x49] sm:$0xff]
        %v374 = vld [vmem:[%s314 + $0x51] sm:$0xff]
        %v375 = vld [vmem:[%s314 + $0x61] sm:$0xff]
        %v376 = vld [vmem:[%s314 + $0x69] sm:$0xff]
        %v377 = vld [vmem:[%s314 + $0x79] sm:$0xff]
        %v378 = vld [vmem:[%s314 + $0x81] sm:$0xff]
        %v379 = vld [vmem:[%s314 + $0x91] sm:$0xff]
        %v380 = vld [vmem:[%s314 + $0x99] sm:$0xff]
        %v381 = vld [vmem:[%s314 + $0xa9] sm:$0xff]
        %v382 = vld [vmem:[%s314 + $0xb1] sm:$0xff]
        %v383 = vlaneseq
        %v384 = vshrl.u32 %v383, 7
        %v385 = vsub.s32 1, %v384
        %v386 = vrot.slane %v311, %v385
        %v387 = vmul.f32 %v367, %v386
        %v388 = vmul.f32 %v368, %v386
        %v389 = vmul.f32 %v369, %v386
        %v390 = vmul.f32 %v370, %v386
        %v391 = vmul.f32 %v371, %v386
        %v392 = vmul.f32 %v372, %v386
        %v393 = vmul.f32 %v373, %v386
        %v394 = vmul.f32 %v374, %v386
        %v395 = vmul.f32 %v375, %v386
        %v396 = vmul.f32 %v376, %v386
        %v397 = vmul.f32 %v377, %v386
        %v398 = vmul.f32 %v378, %v386
        %v399 = vmul.f32 %v379, %v386
        %v400 = vmul.f32 %v380, %v386
        %v401 = vmul.f32 %v381, %v386
        %v402 = vmul.f32 %v382, %v386
        %v403 = vadd.f32 %v351, %v387
        %v404 = vadd.f32 %v352, %v388
        %v405 = vadd.f32 %v353, %v389
        %v406 = vadd.f32 %v354, %v390
        %v407 = vadd.f32 %v355, %v391
        %v408 = vadd.f32 %v356, %v392
        %v409 = vadd.f32 %v357, %v393
        %v410 = vadd.f32 %v358, %v394
        %v411 = vadd.f32 %v359, %v395
        %v412 = vadd.f32 %v360, %v396
        %v413 = vadd.f32 %v361, %v397
        %v414 = vadd.f32 %v362, %v398
        %v415 = vadd.f32 %v363, %v399
        %v416 = vadd.f32 %v364, %v400
        %v417 = vadd.f32 %v365, %v401
        %v418 = vadd.f32 %v366, %v402
        %v419 = vld [vmem:[%s314 + $0x2] sm:$0xff]
        %v420 = vld [vmem:[%s314 + $0xa] sm:$0xff]
        %v421 = vld [vmem:[%s314 + $0x1a] sm:$0xff]
        %v422 = vld [vmem:[%s314 + $0x22] sm:$0xff]
        %v423 = vld [vmem:[%s314 + $0x32] sm:$0xff]
        %v424 = vld [vmem:[%s314 + $0x3a] sm:$0xff]
        %v425 = vld [vmem:[%s314 + $0x4a] sm:$0xff]
        %v426 = vld [vmem:[%s314 + $0x52] sm:$0xff]
        %v427 = vld [vmem:[%s314 + $0x62] sm:$0xff]
        %v428 = vld [vmem:[%s314 + $0x6a] sm:$0xff]
        %v429 = vld [vmem:[%s314 + $0x7a] sm:$0xff]
        %v430 = vld [vmem:[%s314 + $0x82] sm:$0xff]
        %v431 = vld [vmem:[%s314 + $0x92] sm:$0xff]
        %v432 = vld [vmem:[%s314 + $0x9a] sm:$0xff]
        %v433 = vld [vmem:[%s314 + $0xaa] sm:$0xff]
        %v434 = vld [vmem:[%s314 + $0xb2] sm:$0xff]
        %v435 = vlaneseq
        %v436 = vshrl.u32 %v435, 7
        %v437 = vsub.s32 2, %v436
        %v438 = vrot.slane %v311, %v437
        %v439 = vmul.f32 %v419, %v438
        %v440 = vmul.f32 %v420, %v438
        %v441 = vmul.f32 %v421, %v438
        %v442 = vmul.f32 %v422, %v438
        %v443 = vmul.f32 %v423, %v438
        %v444 = vmul.f32 %v424, %v438
        %v445 = vmul.f32 %v425, %v438
        %v446 = vmul.f32 %v426, %v438
        %v447 = vmul.f32 %v427, %v438
        %v448 = vmul.f32 %v428, %v438
        %v449 = vmul.f32 %v429, %v438
        %v450 = vmul.f32 %v430, %v438
        %v451 = vmul.f32 %v431, %v438
        %v452 = vmul.f32 %v432, %v438
        %v453 = vmul.f32 %v433, %v438
        %v454 = vmul.f32 %v434, %v438
        %v455 = vadd.f32 %v403, %v439
        %v456 = vadd.f32 %v404, %v440
        %v457 = vadd.f32 %v405, %v441
        %v458 = vadd.f32 %v406, %v442
        %v459 = vadd.f32 %v407, %v443
        %v460 = vadd.f32 %v408, %v444
        %v461 = vadd.f32 %v409, %v445
        %v462 = vadd.f32 %v410, %v446
        %v463 = vadd.f32 %v411, %v447
        %v464 = vadd.f32 %v412, %v448
        %v465 = vadd.f32 %v413, %v449
        %v466 = vadd.f32 %v414, %v450
        %v467 = vadd.f32 %v415, %v451
        %v468 = vadd.f32 %v416, %v452
        %v469 = vadd.f32 %v417, %v453
        %v470 = vadd.f32 %v418, %v454
        %s471 = sadd.s32 %s310, 1
        %s472 = smul.u32 %s471, 24
        %s473 = scalar_lea.vmem %s266, %s472 [#allocation2]
        %v474 = vld [vmem:[%s473] sm:$0xff]
        %v475 = vld [vmem:[%s473 + $0x8] sm:$0xff]
        %v476 = vld [vmem:[%s473 + $0x18] sm:$0xff]
        %v477 = vld [vmem:[%s473 + $0x20] sm:$0xff]
        %v478 = vld [vmem:[%s473 + $0x30] sm:$0xff]
        %v479 = vld [vmem:[%s473 + $0x38] sm:$0xff]
        %v480 = vld [vmem:[%s473 + $0x48] sm:$0xff]
        %v481 = vld [vmem:[%s473 + $0x50] sm:$0xff]
        %v482 = vld [vmem:[%s473 + $0x60] sm:$0xff]
        %v483 = vld [vmem:[%s473 + $0x68] sm:$0xff]
        %v484 = vld [vmem:[%s473 + $0x78] sm:$0xff]
        %v485 = vld [vmem:[%s473 + $0x80] sm:$0xff]
        %v486 = vld [vmem:[%s473 + $0x90] sm:$0xff]
        %v487 = vld [vmem:[%s473 + $0x98] sm:$0xff]
        %v488 = vld [vmem:[%s473 + $0xa8] sm:$0xff]
        %v489 = vld [vmem:[%s473 + $0xb0] sm:$0xff]
        %v490 = vlaneseq
        %v491 = vshrl.u32 %v490, 7
        %v492 = vsub.s32 3, %v491
        %v493 = vrot.slane %v311, %v492
        %v494 = vmul.f32 %v474, %v493
        %v495 = vmul.f32 %v475, %v493
        %v496 = vmul.f32 %v476, %v493
        %v497 = vmul.f32 %v477, %v493
        %v498 = vmul.f32 %v478, %v493
        %v499 = vmul.f32 %v479, %v493
        %v500 = vmul.f32 %v480, %v493
        %v501 = vmul.f32 %v481, %v493
        %v502 = vmul.f32 %v482, %v493
        %v503 = vmul.f32 %v483, %v493
        %v504 = vmul.f32 %v484, %v493
        %v505 = vmul.f32 %v485, %v493
        %v506 = vmul.f32 %v486, %v493
        %v507 = vmul.f32 %v487, %v493
        %v508 = vmul.f32 %v488, %v493
        %v509 = vmul.f32 %v489, %v493
        %v510 = vadd.f32 %v455, %v494
        %v511 = vadd.f32 %v456, %v495
        %v512 = vadd.f32 %v457, %v496
        %v513 = vadd.f32 %v458, %v497
        %v514 = vadd.f32 %v459, %v498
        %v515 = vadd.f32 %v460, %v499
        %v516 = vadd.f32 %v461, %v500
        %v517 = vadd.f32 %v462, %v501
        %v518 = vadd.f32 %v463, %v502
        %v519 = vadd.f32 %v464, %v503
        %v520 = vadd.f32 %v465, %v504
        %v521 = vadd.f32 %v466, %v505
        %v522 = vadd.f32 %v467, %v506
        %v523 = vadd.f32 %v468, %v507
        %v524 = vadd.f32 %v469, %v508
        %v525 = vadd.f32 %v470, %v509
        %v526 = vld [vmem:[%s473 + $0x1] sm:$0xff]
        %v527 = vld [vmem:[%s473 + $0x9] sm:$0xff]
        %v528 = vld [vmem:[%s473 + $0x19] sm:$0xff]
        %v529 = vld [vmem:[%s473 + $0x21] sm:$0xff]
        %v530 = vld [vmem:[%s473 + $0x31] sm:$0xff]
        %v531 = vld [vmem:[%s473 + $0x39] sm:$0xff]
        %v532 = vld [vmem:[%s473 + $0x49] sm:$0xff]
        %v533 = vld [vmem:[%s473 + $0x51] sm:$0xff]
        %v534 = vld [vmem:[%s473 + $0x61] sm:$0xff]
        %v535 = vld [vmem:[%s473 + $0x69] sm:$0xff]
        %v536 = vld [vmem:[%s473 + $0x79] sm:$0xff]
        %v537 = vld [vmem:[%s473 + $0x81] sm:$0xff]
        %v538 = vld [vmem:[%s473 + $0x91] sm:$0xff]
        %v539 = vld [vmem:[%s473 + $0x99] sm:$0xff]
        %v540 = vld [vmem:[%s473 + $0xa9] sm:$0xff]
        %v541 = vld [vmem:[%s473 + $0xb1] sm:$0xff]
        %v542 = vlaneseq
        %v543 = vshrl.u32 %v542, 7
        %v544 = vsub.s32 4, %v543
        %v545 = vrot.slane %v311, %v544
        %v546 = vmul.f32 %v526, %v545
        %v547 = vmul.f32 %v527, %v545
        %v548 = vmul.f32 %v528, %v545
        %v549 = vmul.f32 %v529, %v545
        %v550 = vmul.f32 %v530, %v545
        %v551 = vmul.f32 %v531, %v545
        %v552 = vmul.f32 %v532, %v545
        %v553 = vmul.f32 %v533, %v545
        %v554 = vmul.f32 %v534, %v545
        %v555 = vmul.f32 %v535, %v545
        %v556 = vmul.f32 %v536, %v545
        %v557 = vmul.f32 %v537, %v545
        %v558 = vmul.f32 %v538, %v545
        %v559 = vmul.f32 %v539, %v545
        %v560 = vmul.f32 %v540, %v545
        %v561 = vmul.f32 %v541, %v545
        %v562 = vadd.f32 %v510, %v546
        %v563 = vadd.f32 %v511, %v547
        %v564 = vadd.f32 %v512, %v548
        %v565 = vadd.f32 %v513, %v549
        %v566 = vadd.f32 %v514, %v550
        %v567 = vadd.f32 %v515, %v551
        %v568 = vadd.f32 %v516, %v552
        %v569 = vadd.f32 %v517, %v553
        %v570 = vadd.f32 %v518, %v554
        %v571 = vadd.f32 %v519, %v555
        %v572 = vadd.f32 %v520, %v556
        %v573 = vadd.f32 %v521, %v557
        %v574 = vadd.f32 %v522, %v558
        %v575 = vadd.f32 %v523, %v559
        %v576 = vadd.f32 %v524, %v560
        %v577 = vadd.f32 %v525, %v561
        %v578 = vld [vmem:[%s473 + $0x2] sm:$0xff]
        %v579 = vld [vmem:[%s473 + $0xa] sm:$0xff]
        %v580 = vld [vmem:[%s473 + $0x1a] sm:$0xff]
        %v581 = vld [vmem:[%s473 + $0x22] sm:$0xff]
        %v582 = vld [vmem:[%s473 + $0x32] sm:$0xff]
        %v583 = vld [vmem:[%s473 + $0x3a] sm:$0xff]
        %v584 = vld [vmem:[%s473 + $0x4a] sm:$0xff]
        %v585 = vld [vmem:[%s473 + $0x52] sm:$0xff]
        %v586 = vld [vmem:[%s473 + $0x62] sm:$0xff]
        %v587 = vld [vmem:[%s473 + $0x6a] sm:$0xff]
        %v588 = vld [vmem:[%s473 + $0x7a] sm:$0xff]
        %v589 = vld [vmem:[%s473 + $0x82] sm:$0xff]
        %v590 = vld [vmem:[%s473 + $0x92] sm:$0xff]
        %v591 = vld [vmem:[%s473 + $0x9a] sm:$0xff]
        %v592 = vld [vmem:[%s473 + $0xaa] sm:$0xff]
        %v593 = vld [vmem:[%s473 + $0xb2] sm:$0xff]
        %v594 = vlaneseq
        %v595 = vshrl.u32 %v594, 7
        %v596 = vsub.s32 5, %v595
        %v597 = vrot.slane %v311, %v596
        %v598 = vmul.f32 %v578, %v597
        %v599 = vmul.f32 %v579, %v597
        %v600 = vmul.f32 %v580, %v597
        %v601 = vmul.f32 %v581, %v597
        %v602 = vmul.f32 %v582, %v597
        %v603 = vmul.f32 %v583, %v597
        %v604 = vmul.f32 %v584, %v597
        %v605 = vmul.f32 %v585, %v597
        %v606 = vmul.f32 %v586, %v597
        %v607 = vmul.f32 %v587, %v597
        %v608 = vmul.f32 %v588, %v597
        %v609 = vmul.f32 %v589, %v597
        %v610 = vmul.f32 %v590, %v597
        %v611 = vmul.f32 %v591, %v597
        %v612 = vmul.f32 %v592, %v597
        %v613 = vmul.f32 %v593, %v597
        %v614 = vadd.f32 %v562, %v598
        %v615 = vadd.f32 %v563, %v599
        %v616 = vadd.f32 %v564, %v600
        %v617 = vadd.f32 %v565, %v601
        %v618 = vadd.f32 %v566, %v602
        %v619 = vadd.f32 %v567, %v603
        %v620 = vadd.f32 %v568, %v604
        %v621 = vadd.f32 %v569, %v605
        %v622 = vadd.f32 %v570, %v606
        %v623 = vadd.f32 %v571, %v607
        %v624 = vadd.f32 %v572, %v608
        %v625 = vadd.f32 %v573, %v609
        %v626 = vadd.f32 %v574, %v610
        %v627 = vadd.f32 %v575, %v611
        %v628 = vadd.f32 %v576, %v612
        %v629 = vadd.f32 %v577, %v613
        %s630 = sadd.s32 %s310, 2
        %s631 = smul.u32 %s630, 24
        %s632 = scalar_lea.vmem %s266, %s631 [#allocation2]
        %v633 = vld [vmem:[%s632] sm:$0xff]
        %v634 = vld [vmem:[%s632 + $0x8] sm:$0xff]
        %v635 = vld [vmem:[%s632 + $0x18] sm:$0xff]
        %v636 = vld [vmem:[%s632 + $0x20] sm:$0xff]
        %v637 = vld [vmem:[%s632 + $0x30] sm:$0xff]
        %v638 = vld [vmem:[%s632 + $0x38] sm:$0xff]
        %v639 = vld [vmem:[%s632 + $0x48] sm:$0xff]
        %v640 = vld [vmem:[%s632 + $0x50] sm:$0xff]
        %v641 = vld [vmem:[%s632 + $0x60] sm:$0xff]
        %v642 = vld [vmem:[%s632 + $0x68] sm:$0xff]
        %v643 = vld [vmem:[%s632 + $0x78] sm:$0xff]
        %v644 = vld [vmem:[%s632 + $0x80] sm:$0xff]
        %v645 = vld [vmem:[%s632 + $0x90] sm:$0xff]
        %v646 = vld [vmem:[%s632 + $0x98] sm:$0xff]
        %v647 = vld [vmem:[%s632 + $0xa8] sm:$0xff]
        %v648 = vld [vmem:[%s632 + $0xb0] sm:$0xff]
        %v649 = vlaneseq
        %v650 = vshrl.u32 %v649, 7
        %v651 = vsub.s32 6, %v650
        %v652 = vrot.slane %v311, %v651
        %v653 = vmul.f32 %v633, %v652
        %v654 = vmul.f32 %v634, %v652
        %v655 = vmul.f32 %v635, %v652
        %v656 = vmul.f32 %v636, %v652
        %v657 = vmul.f32 %v637, %v652
        %v658 = vmul.f32 %v638, %v652
        %v659 = vmul.f32 %v639, %v652
        %v660 = vmul.f32 %v640, %v652
        %v661 = vmul.f32 %v641, %v652
        %v662 = vmul.f32 %v642, %v652
        %v663 = vmul.f32 %v643, %v652
        %v664 = vmul.f32 %v644, %v652
        %v665 = vmul.f32 %v645, %v652
        %v666 = vmul.f32 %v646, %v652
        %v667 = vmul.f32 %v647, %v652
        %v668 = vmul.f32 %v648, %v652
        %v669 = vadd.f32 %v614, %v653
        %v670 = vadd.f32 %v615, %v654
        %v671 = vadd.f32 %v616, %v655
        %v672 = vadd.f32 %v617, %v656
        %v673 = vadd.f32 %v618, %v657
        %v674 = vadd.f32 %v619, %v658
        %v675 = vadd.f32 %v620, %v659
        %v676 = vadd.f32 %v621, %v660
        %v677 = vadd.f32 %v622, %v661
        %v678 = vadd.f32 %v623, %v662
        %v679 = vadd.f32 %v624, %v663
        %v680 = vadd.f32 %v625, %v664
        %v681 = vadd.f32 %v626, %v665
        %v682 = vadd.f32 %v627, %v666
        %v683 = vadd.f32 %v628, %v667
        %v684 = vadd.f32 %v629, %v668
        %v685 = vld [vmem:[%s632 + $0x1] sm:$0xff]
        %v686 = vld [vmem:[%s632 + $0x9] sm:$0xff]
        %v687 = vld [vmem:[%s632 + $0x19] sm:$0xff]
        %v688 = vld [vmem:[%s632 + $0x21] sm:$0xff]
        %v689 = vld [vmem:[%s632 + $0x31] sm:$0xff]
        %v690 = vld [vmem:[%s632 + $0x39] sm:$0xff]
        %v691 = vld [vmem:[%s632 + $0x49] sm:$0xff]
        %v692 = vld [vmem:[%s632 + $0x51] sm:$0xff]
        %v693 = vld [vmem:[%s632 + $0x61] sm:$0xff]
        %v694 = vld [vmem:[%s632 + $0x69] sm:$0xff]
        %v695 = vld [vmem:[%s632 + $0x79] sm:$0xff]
        %v696 = vld [vmem:[%s632 + $0x81] sm:$0xff]
        %v697 = vld [vmem:[%s632 + $0x91] sm:$0xff]
        %v698 = vld [vmem:[%s632 + $0x99] sm:$0xff]
        %v699 = vld [vmem:[%s632 + $0xa9] sm:$0xff]
        %v700 = vld [vmem:[%s632 + $0xb1] sm:$0xff]
        %v701 = vlaneseq
        %v702 = vshrl.u32 %v701, 7
        %v703 = vsub.s32 7, %v702
        %v704 = vrot.slane %v311, %v703
        %v705 = vmul.f32 %v685, %v704
        %v706 = vmul.f32 %v686, %v704
        %v707 = vmul.f32 %v687, %v704
        %v708 = vmul.f32 %v688, %v704
        %v709 = vmul.f32 %v689, %v704
        %v710 = vmul.f32 %v690, %v704
        %v711 = vmul.f32 %v691, %v704
        %v712 = vmul.f32 %v692, %v704
        %v713 = vmul.f32 %v693, %v704
        %v714 = vmul.f32 %v694, %v704
        %v715 = vmul.f32 %v695, %v704
        %v716 = vmul.f32 %v696, %v704
        %v717 = vmul.f32 %v697, %v704
        %v718 = vmul.f32 %v698, %v704
        %v719 = vmul.f32 %v699, %v704
        %v720 = vmul.f32 %v700, %v704
        %v721 = vadd.f32 %v669, %v705
        %v722 = vadd.f32 %v670, %v706
        %v723 = vadd.f32 %v671, %v707
        %v724 = vadd.f32 %v672, %v708
        %v725 = vadd.f32 %v673, %v709
        %v726 = vadd.f32 %v674, %v710
        %v727 = vadd.f32 %v675, %v711
        %v728 = vadd.f32 %v676, %v712
        %v729 = vadd.f32 %v677, %v713
        %v730 = vadd.f32 %v678, %v714
        %v731 = vadd.f32 %v679, %v715
        %v732 = vadd.f32 %v680, %v716
        %v733 = vadd.f32 %v681, %v717
        %v734 = vadd.f32 %v682, %v718
        %v735 = vadd.f32 %v683, %v719
        %v736 = vadd.f32 %v684, %v720
        %v737 = vld [vmem:[%s632 + $0x2] sm:$0xff]
        %v738 = vld [vmem:[%s632 + $0xa] sm:$0xff]
        %v739 = vld [vmem:[%s632 + $0x1a] sm:$0xff]
        %v740 = vld [vmem:[%s632 + $0x22] sm:$0xff]
        %v741 = vld [vmem:[%s632 + $0x32] sm:$0xff]
        %v742 = vld [vmem:[%s632 + $0x3a] sm:$0xff]
        %v743 = vld [vmem:[%s632 + $0x4a] sm:$0xff]
        %v744 = vld [vmem:[%s632 + $0x52] sm:$0xff]
        %v745 = vld [vmem:[%s632 + $0x62] sm:$0xff]
        %v746 = vld [vmem:[%s632 + $0x6a] sm:$0xff]
        %v747 = vld [vmem:[%s632 + $0x7a] sm:$0xff]
        %v748 = vld [vmem:[%s632 + $0x82] sm:$0xff]
        %v749 = vld [vmem:[%s632 + $0x92] sm:$0xff]
        %v750 = vld [vmem:[%s632 + $0x9a] sm:$0xff]
        %v751 = vld [vmem:[%s632 + $0xaa] sm:$0xff]
        %v752 = vld [vmem:[%s632 + $0xb2] sm:$0xff]
        %v753 = vlaneseq
        %v754 = vshrl.u32 %v753, 7
        %v755 = vsub.s32 0, %v754
        %v756 = vrot.slane %v312, %v755
        %v757 = vmul.f32 %v737, %v756
        %v758 = vmul.f32 %v738, %v756
        %v759 = vmul.f32 %v739, %v756
        %v760 = vmul.f32 %v740, %v756
        %v761 = vmul.f32 %v741, %v756
        %v762 = vmul.f32 %v742, %v756
        %v763 = vmul.f32 %v743, %v756
        %v764 = vmul.f32 %v744, %v756
        %v765 = vmul.f32 %v745, %v756
        %v766 = vmul.f32 %v746, %v756
        %v767 = vmul.f32 %v747, %v756
        %v768 = vmul.f32 %v748, %v756
        %v769 = vmul.f32 %v749, %v756
        %v770 = vmul.f32 %v750, %v756
        %v771 = vmul.f32 %v751, %v756
        %v772 = vmul.f32 %v752, %v756
        %v773 = vadd.f32 %v721, %v757
        %v774 = vadd.f32 %v722, %v758
        %v775 = vadd.f32 %v723, %v759
        %v776 = vadd.f32 %v724, %v760
        %v777 = vadd.f32 %v725, %v761
        %v778 = vadd.f32 %v726, %v762
        %v779 = vadd.f32 %v727, %v763
        %v780 = vadd.f32 %v728, %v764
        %v781 = vadd.f32 %v729, %v765
        %v782 = vadd.f32 %v730, %v766
        %v783 = vadd.f32 %v731, %v767
        %v784 = vadd.f32 %v732, %v768
        %v785 = vadd.f32 %v733, %v769
        %v786 = vadd.f32 %v734, %v770
        %v787 = vadd.f32 %v735, %v771
        %v788 = vadd.f32 %v736, %v772
        %v789 = vld [vmem:[#allocation7] sm:$0x1]
        %v791 = vlaneseq
        %v792 = vshrl.u32 %v791, 7
        %v793 = vsub.s32 0, %v792
        %v794 = vrot.slane %v789, %v793
        %v796 = vadd.f32 %v773, %v794
        %v797 = vadd.f32 %v774, %v794
        %v798 = vadd.f32 %v775, %v794
        %v799 = vadd.f32 %v776, %v794
        %v800 = vadd.f32 %v777, %v794
        %v801 = vadd.f32 %v778, %v794
        %v802 = vadd.f32 %v779, %v794
        %v803 = vadd.f32 %v780, %v794
        %v804 = vadd.f32 %v781, %v794
        %v805 = vadd.f32 %v782, %v794
        %v806 = vadd.f32 %v783, %v794
        %v807 = vadd.f32 %v784, %v794
        %v808 = vadd.f32 %v785, %v794
        %v809 = vadd.f32 %v786, %v794
        %v810 = vadd.f32 %v787, %v794
        %v811 = vadd.f32 %v788, %v794
        %v812 = vld [vmem:[#allocation8] sm:$0xff]
        %v813 = vld [vmem:[#allocation10] sm:$0x1]
        %v815 = vlaneseq
        %v816 = vshrl.u32 %v815, 7
        %v817 = vsub.s32 0, %v816
        %v818 = vrot.slane %v813, %v817
        %vm820 = vcmask 64512
        %v822 = vsel %vm820, %v796, 0
        %v825 = vsel %vm820, %v797, 0
        %v828 = vsel %vm820, %v798, 0
        %v831 = vsel %vm820, %v799, 0
        %v834 = vsel %vm820, %v800, 0
        %v837 = vsel %vm820, %v801, 0
        %v840 = vsel %vm820, %v802, 0
        %v843 = vsel %vm820, %v803, 0
        %v846 = vsel %vm820, %v804, 0
        %v849 = vsel %vm820, %v805, 0
        %v852 = vsel %vm820, %v806, 0
        %v855 = vsel %vm820, %v807, 0
        %v858 = vsel %vm820, %v808, 0
        %v861 = vsel %vm820, %v809, 0
        %v864 = vsel %vm820, %v810, 0
        %v867 = vsel %vm820, %v811, 0
        %869 = vmatprep.subr.mxu0 0.0
        %870 = vmatpush1.msra.mxu0 %v812
        %871 = vmatprep.subr.mxu0 0.0
        %872 = vmatpush1.msra.mxu0 0.0
        %873 = vmatprep.subr.mxu0 0.0
        %874 = vmatpush1.msra.mxu0 0.0
        %875 = vmatprep.subr.mxu0 0.0
        %876 = vmatpush1.msra.mxu0 0.0
        %877 = vmatprep.subr.mxu0 0.0
        %878 = vmatpush1.msra.mxu0 0.0
        %879 = vmatprep.subr.mxu0 0.0
        %880 = vmatpush1.msra.mxu0 0.0
        %881 = vmatprep.subr.mxu0 0.0
        %882 = vmatpush1.msra.mxu0 0.0
        %883 = vmatprep.subr.mxu0 0.0
        %884 = vmatpush1.msra.mxu0 0.0
        %885 = vmatprep.subr.mxu0 0.0
        %886 = vmatpush1.msra.mxu0 0.0
        %887 = vmatprep.subr.mxu0 0.0
        %888 = vmatpush1.msra.mxu0 0.0
        %889 = vmatprep.subr.mxu0 0.0
        %890 = vmatpush1.msra.mxu0 0.0
        %891 = vmatprep.subr.mxu0 0.0
        %892 = vmatpush1.msra.mxu0 0.0
        %893 = vmatprep.subr.mxu0 0.0
        %894 = vmatpush1.msra.mxu0 0.0
        %895 = vmatprep.subr.mxu0 0.0
        %896 = vmatpush1.msra.mxu0 0.0
        %897 = vmatprep.subr.mxu0 0.0
        %898 = vmatpush1.msra.mxu0 0.0
        %899 = vmatprep.subr.mxu0 0.0
        %900 = vmatpush1.msra.mxu0 0.0
        %901 = vmatprep.subr.mxu0 0.0
        %902 = vmatpush1.msra.mxu0 0.0
        %903 = vmatprep.subr.mxu0 0.0
        %904 = vmatpush1.msra.mxu0 0.0
        %905 = vmatprep.subr.mxu0 0.0
        %906 = vmatpush1.msra.mxu0 0.0
        %907 = vmatprep.subr.mxu0 0.0
        %908 = vmatpush1.msra.mxu0 0.0
        %909 = vmatprep.subr.mxu0 0.0
        %910 = vmatpush1.msra.mxu0 0.0
        %911 = vmatprep.subr.mxu0 0.0
        %912 = vmatpush1.msra.mxu0 0.0
        %913 = vmatprep.subr.mxu0 0.0
        %914 = vmatpush1.msra.mxu0 0.0
        %915 = vmatprep.subr.mxu0 0.0
        %916 = vmatpush1.msra.mxu0 0.0
        %917 = vmatprep.subr.mxu0 0.0
        %918 = vmatpush1.msra.mxu0 0.0
        %919 = vmatprep.subr.mxu0 0.0
        %920 = vmatpush1.msra.mxu0 0.0
        %921 = vmatprep.subr.mxu0 0.0
        %922 = vmatpush1.msra.mxu0 0.0
        %923 = vmatprep.subr.mxu0 0.0
        %924 = vmatpush1.msra.mxu0 0.0
        %925 = vmatprep.subr.mxu0 0.0
        %926 = vmatpush1.msra.mxu0 0.0
        %927 = vmatprep.subr.mxu0 0.0
        %928 = vmatpush1.msra.mxu0 0.0
        %929 = vmatprep.subr.mxu0 0.0
        %930 = vmatpush1.msra.mxu0 0.0
        %931 = vmatprep.subr.mxu0 0.0
        %932 = vmatpush1.msra.mxu0 0.0
        %933 = vmatprep.mubr.f32.mxu0 0.0
        %934 = vmatmul.mubr.f32.gmra.mrb[0].mxu0 %v822
        %v935 = vpop.f32.mrb[0].mxu0
        %v936 = vadd.f32 %v818, %v935
        %v937 = vpop.f32.mrb[0].mxu0
        %938 = vmatprep.mubr.f32.mxu0 0.0
        %939 = vmatmul.mubr.f32.gmra.mrb[0].mxu0 %v825
        %v940 = vpop.f32.mrb[0].mxu0
        %v941 = vadd.f32 %v818, %v940
        %v942 = vpop.f32.mrb[0].mxu0
        %943 = vmatprep.mubr.f32.mxu0 0.0
        %944 = vmatmul.mubr.f32.gmra.mrb[0].mxu0 %v828
        %v945 = vpop.f32.mrb[0].mxu0
        %v946 = vadd.f32 %v818, %v945
        %v947 = vpop.f32.mrb[0].mxu0
        %948 = vmatprep.mubr.f32.mxu0 0.0
        %949 = vmatmul.mubr.f32.gmra.mrb[0].mxu0 %v831
        %v950 = vpop.f32.mrb[0].mxu0
        %v951 = vadd.f32 %v818, %v950
        %v952 = vpop.f32.mrb[0].mxu0
        %953 = vmatprep.mubr.f32.mxu0 0.0
        %954 = vmatmul.mubr.f32.gmra.mrb[0].mxu0 %v834
        %v955 = vpop.f32.mrb[0].mxu0
        %v956 = vadd.f32 %v818, %v955
        %v957 = vpop.f32.mrb[0].mxu0
        %958 = vmatprep.mubr.f32.mxu0 0.0
        %959 = vmatmul.mubr.f32.gmra.mrb[0].mxu0 %v837
        %v960 = vpop.f32.mrb[0].mxu0
        %v961 = vadd.f32 %v818, %v960
        %v962 = vpop.f32.mrb[0].mxu0
        %963 = vmatprep.mubr.f32.mxu0 0.0
        %964 = vmatmul.mubr.f32.gmra.mrb[0].mxu0 %v840
        %v965 = vpop.f32.mrb[0].mxu0
        %v966 = vadd.f32 %v818, %v965
        %v967 = vpop.f32.mrb[0].mxu0
        %968 = vmatprep.mubr.f32.mxu0 0.0
        %969 = vmatmul.mubr.f32.gmra.mrb[0].mxu0 %v843
        %v970 = vpop.f32.mrb[0].mxu0
        %v971 = vadd.f32 %v818, %v970
        %v972 = vpop.f32.mrb[0].mxu0
        %973 = vmatprep.mubr.f32.mxu0 0.0
        %974 = vmatmul.mubr.f32.gmra.mrb[0].mxu0 %v846
        %v975 = vpop.f32.mrb[0].mxu0
        %v976 = vadd.f32 %v818, %v975
        %v977 = vpop.f32.mrb[0].mxu0
        %978 = vmatprep.mubr.f32.mxu0 0.0
        %979 = vmatmul.mubr.f32.gmra.mrb[0].mxu0 %v849
        %v980 = vpop.f32.mrb[0].mxu0
        %v981 = vadd.f32 %v818, %v980
        %v982 = vpop.f32.mrb[0].mxu0
        %983 = vmatprep.mubr.f32.mxu0 0.0
        %984 = vmatmul.mubr.f32.gmra.mrb[0].mxu0 %v852
        %v985 = vpop.f32.mrb[0].mxu0
        %v986 = vadd.f32 %v818, %v985
        %v987 = vpop.f32.mrb[0].mxu0
        %988 = vmatprep.mubr.f32.mxu0 0.0
        %989 = vmatmul.mubr.f32.gmra.mrb[0].mxu0 %v855
        %v990 = vpop.f32.mrb[0].mxu0
        %v991 = vadd.f32 %v818, %v990
        %v992 = vpop.f32.mrb[0].mxu0
        %993 = vmatprep.mubr.f32.mxu0 0.0
        %994 = vmatmul.mubr.f32.gmra.mrb[0].mxu0 %v858
        %v995 = vpop.f32.mrb[0].mxu0
        %v996 = vadd.f32 %v818, %v995
        %v997 = vpop.f32.mrb[0].mxu0
        %998 = vmatprep.mubr.f32.mxu0 0.0
        %999 = vmatmul.mubr.f32.gmra.mrb[0].mxu0 %v861
        %v1000 = vpop.f32.mrb[0].mxu0
        %v1001 = vadd.f32 %v818, %v1000
        %v1002 = vpop.f32.mrb[0].mxu0
        %1003 = vmatprep.mubr.f32.mxu0 0.0
        %1004 = vmatmul.mubr.f32.gmra.mrb[0].mxu0 %v864
        %v1005 = vpop.f32.mrb[0].mxu0
        %v1006 = vadd.f32 %v818, %v1005
        %v1007 = vpop.f32.mrb[0].mxu0
        %1008 = vmatprep.mubr.f32.mxu0 0.0
        %1009 = vmatmul.mubr.f32.gmra.mrb[0].mxu0 %v867
        %v1010 = vpop.f32.mrb[0].mxu0
        %v1011 = vadd.f32 %v818, %v1010
        %v1012 = vpop.f32.mrb[0].mxu0
        %1013 = vdwg.mxu0
        %1014 = vst.msk [vmem:[%s308] sm:$0xff] %vm820, %v936
        %1015 = vst.msk [vmem:[%s308 + $0x8] sm:$0xff] %vm820, %v941
        %1016 = vst.msk [vmem:[%s308 + $0x10] sm:$0xff] %vm820, %v946
        %1017 = vst.msk [vmem:[%s308 + $0x18] sm:$0xff] %vm820, %v951
        %1018 = vst.msk [vmem:[%s308 + $0x20] sm:$0xff] %vm820, %v956
        %1019 = vst.msk [vmem:[%s308 + $0x28] sm:$0xff] %vm820, %v961
        %1020 = vst.msk [vmem:[%s308 + $0x30] sm:$0xff] %vm820, %v966
        %1021 = vst.msk [vmem:[%s308 + $0x38] sm:$0xff] %vm820, %v971
        %1022 = vst.msk [vmem:[%s308 + $0x40] sm:$0xff] %vm820, %v976
        %1023 = vst.msk [vmem:[%s308 + $0x48] sm:$0xff] %vm820, %v981
        %1024 = vst.msk [vmem:[%s308 + $0x50] sm:$0xff] %vm820, %v986
        %1025 = vst.msk [vmem:[%s308 + $0x58] sm:$0xff] %vm820, %v991
        %1026 = vst.msk [vmem:[%s308 + $0x60] sm:$0xff] %vm820, %v996
        %1027 = vst.msk [vmem:[%s308 + $0x68] sm:$0xff] %vm820, %v1001
        %1028 = vst.msk [vmem:[%s308 + $0x70] sm:$0xff] %vm820, %v1006
        %1029 = vst.msk [vmem:[%s308 + $0x78] sm:$0xff] %vm820, %v1011
        %s1030 = sand.u32 %s156, 1
        %s1031 = scalar_lea.sflag [#allocation4], %s1030
        %s1032 = sand.u32 %s156, 1
        %s1033 = smul.addr %s1032, 128
        %s1034 = scalar_lea.vmem [#allocation11], %s1033
        // Predicated region
        $region61: #{tpu_custom_call.1} parent=39 // pred_check
          %p1035 = pneg %p166
        $region62: #{tpu_custom_call.1} parent=39 // pred_check_branch
          %1037 = sbr.rel (%p1035) target = $region64
        $region63: #{tpu_custom_call.1} parent=39 // pred_region
          %s1038 = smul.u32 8, %s29
          %s1040 = ssub.s32 2048, 2048
          %1041 = vsyncadd %s1031, %s1040
          %s1042 = smul.addr %s1038, 2
          %s1043 = smul.addr %s28, 32
          %s1044 = sadd.s32 %s1042, %s1043
          %s1045 = smul.addr %s1044, 128
          %s1046 = scalar_lea.hbm %s5, %s1045
          %s1047 = sshll.u32 %s1034, 4
          %s1048 = int_to_ptr.vmem [resolvable:$true] %s1047
          %1053 = dma.vmem_to_hbm [thread:$0]  %s1048, 2048, %s1046, %s1031, 128, 128, 8
        $region64: #{tpu_custom_call.1} parent=39 // pred_fallthru
          _
      $region40: #{tpu_custom_call.1} parent=5 // pred_fallthru
        _
      %p1054 = scmp.le.s32.totalorder 2, %s19
      // Predicated region
      $region65: #{tpu_custom_call.1} parent=5 // pred_check
        %p1055 = pneg %p1054
      $region66: #{tpu_custom_call.1} parent=5 // pred_check_branch
        %1057 = sbr.rel (%p1055) target = $region68
      $region67: #{tpu_custom_call.1} parent=5 // pred_region
        %s1058 = ssub.s32 %s19, 2
        // Predicated region
        $region69: #{tpu_custom_call.1} parent=67 // pred_check
          %p1059 = pneg %p172
        $region70: #{tpu_custom_call.1} parent=67 // pred_check_branch
          %1061 = sbr.rel (%p1059) target = $region72
        $region71: #{tpu_custom_call.1} parent=67 // pred_region
          %s1062 = sand.u32 %s157, 1
          %s1063 = scalar_lea.sflag [#allocation4], %s1062
          %s1064 = sand.u32 %s157, 1
          %s1065 = smul.addr %s1064, 128
          %s1066 = scalar_lea.vmem [#allocation11], %s1065
          %1067 = dma.done %s1063, 2048
        $region72: #{tpu_custom_call.1} parent=67 // pred_fallthru
          _
      $region68: #{tpu_custom_call.1} parent=5 // pred_fallthru
        _
    $region6: #{tpu_custom_call.1} parent=1 // loop_footer
      %s23 = sadd.s32 1, %s19
    $region7: #{tpu_custom_call.1} parent=1 // loop_footer_branch
      %18 = sbr.rel target = $region3
    $region8: #{tpu_custom_call.1} parent=1 // loop_exit
      _
    %1068 = vsyncpa [#allocation3], 1
    %s1069 = scalar_lea.sflag [#allocation3], 1
    %1070 = vsyncpa %s1069, 1
    %1071 = vsyncpa [#allocation6], 1
    %1072 = vsyncpa [#allocation9], 1
    %1073 = vsyncpa [#allocation4], 1
    %s1074 = scalar_lea.sflag [#allocation4], 1
    %1075 = vsyncpa %s1074, 1

</llo_original>
